<compile_context>
chip_gen: v6e
topology: v6e:2x2x1
jax: 0.10.0
libtpu: 0.0.40
codegen_flags: <defaults>
</compile_context>

<pallas_src>
import functools

import numpy as np
import jax
import jax.numpy as jnp
from jax.experimental import pallas as pl
from jax.experimental.pallas import tpu as pltpu

_K = 5                   # filter size
_HALO = _K - 1           # 4 halo rows/cols of the VALID conv
_CARRY0 = _HALO          # scratch rows [4:8): carried halo (prev tile's last 4 rows)
_NEW0 = 2 * _HALO        # scratch rows [8:8+TH): this tile's horizontal pass
_COL_OFF = _K // 2       # centered horizontal window -> crop cols [2:2+ow)

# Dense KV filter (exactly the PyTorch module's weights) -- reference only.
_KV = (np.array(
    [[-1.0,  2.0,  -2.0,  2.0, -1.0],
     [ 2.0, -6.0,   8.0, -6.0,  2.0],
     [-2.0,  8.0, -12.0,  8.0, -2.0],
     [ 2.0, -6.0,   8.0, -6.0,  2.0],
     [-1.0,  2.0,  -2.0,  2.0, -1.0]], dtype=np.float32) / 12.0)

# KV = _WA * outer(a, a) + _WC * outer(c, c),  a=[1,-2,2,-2,1], c=[0,1,-2,1,0]
_WA = -1.0 / 12.0
_WC = -2.0 / 12.0


def _kv_conv_kernel(x_ref, o_ref, ha_ref, hc_ref):
    """One (batch-tile, row-tile) step of the KV-filter convolution.

    x_ref : (BT, TH, WP)   input rows [r*TH, (r+1)*TH), storage dtype
    o_ref : (BT, TH, WP)   padded output: row p / col q hold the true output
                           row p-4 / col q-2 (cropped by the wrapper)
    ha_ref: (BT, TH+8, WP) f32 scratch for the 5-tap horizontal a-pass;
                           rows [4:8) carry the previous tile's last 4 rows,
                           rows [8:8+TH) hold this tile's rows
    hc_ref: same layout for the 3-tap horizontal c-pass
    """
    bt, th, wp = x_ref.shape

    # First row-tile of each batch tile: zero the halo/carry rows.  NOTE:
    # relies on the row-tile grid axis being the innermost, sequentially
    # executed ("arbitrary") axis.
    @pl.when(pl.program_id(1) == 0)
    def _init_carry():
        zeros = jnp.zeros((bt, _NEW0, wp), jnp.float32)
        ha_ref[:, 0:_NEW0, :] = zeros
        hc_ref[:, 0:_NEW0, :] = zeros

    # ---- horizontal (lane) pass: centered symmetric 5-tap window built from
    # 4 XLU lane rotations on the storage dtype (bf16 stays bf16), upcast to
    # f32 only at the combine.  Because the taps are symmetric, only the
    # pair-sums roll(+k)+roll(-k) are needed, and roll wrap-around only lands
    # in columns the wrapper crops.
    for b in range(bt):                       # bt is a small static int (<=8)
        xb = x_ref[b]                         # (TH, WP)
        l1 = pltpu.roll(xb, 1, 1)
        r1 = pltpu.roll(xb, wp - 1, 1)
        l2 = pltpu.roll(xb, 2, 1)
        r2 = pltpu.roll(xb, wp - 2, 1)
        x0 = xb.astype(jnp.float32)
        s1 = l1.astype(jnp.float32) + r1.astype(jnp.float32)   # x[q-1]+x[q+1]
        s2 = l2.astype(jnp.float32) + r2.astype(jnp.float32)   # x[q-2]+x[q+2]
        ha_ref[b, _NEW0:_NEW0 + th, :] = s2 + 2.0 * (x0 - s1)  # 1,-2,2,-2,1
        hc_ref[b, _NEW0:_NEW0 + th, :] = s1 - 2.0 * x0         # (0)1,-2,1(0)

    # ---- vertical (sublane) 5-tap pass over scratch rows [4:8+TH).
    ha = ha_ref[...]
    hc = hc_ref[...]
    va = (ha[:, _CARRY0:_CARRY0 + th, :] + ha[:, _NEW0:_NEW0 + th, :]) + 2.0 * (
        (ha[:, _CARRY0 + 2:_CARRY0 + 2 + th, :]
         - ha[:, _CARRY0 + 1:_CARRY0 + 1 + th, :])
        - ha[:, _CARRY0 + 3:_CARRY0 + 3 + th, :])
    vc = (hc[:, _CARRY0 + 1:_CARRY0 + 1 + th, :]
          + hc[:, _CARRY0 + 3:_CARRY0 + 3 + th, :]) \
        - 2.0 * hc[:, _CARRY0 + 2:_CARRY0 + 2 + th, :]
    o_ref[...] = (_WA * va + _WC * vc).astype(o_ref.dtype)

    # Carry this tile's last 4 horizontal-pass rows into the carry slot for
    # the next row-tile.
    ha_ref[:, _CARRY0:_NEW0, :] = ha_ref[:, th + _CARRY0:th + _NEW0, :]
    hc_ref[:, _CARRY0:_NEW0, :] = hc_ref[:, th + _CARRY0:th + _NEW0, :]


def _round_up(x, m):
    return ((x + m - 1) // m) * m


def _cdiv(a, b):
    return -(-a // b)


def _vmem_capacity_bytes():
    try:
        return int(pltpu.get_tpu_info().vmem_capacity_bytes)
    except Exception:  # best-effort hardware query
        return 128 << 20


def _choose_tiles(n_groups, h, w_pad, in_itemsize, row_mult, budget_bytes):
    """Pick (batch_tile, h_tile) so the per-step working set fits the budget.

    Rough working set per output row: 2x double-buffered input block, 2x
    double-buffered output block, 2 f32 scratch rows and a few f32
    temporaries -> ~(6 + itemsize) f32-row-equivalents.
    """
    row_bytes = w_pad * 4
    live_rows = 6 + in_itemsize
    rows_budget = max(row_mult,
                      (budget_bytes // (live_rows * row_bytes))
                      // row_mult * row_mult)
    th = min(_round_up(h, row_mult), rows_budget)
    if th >= h:
        # Whole image per row-tile: batch a few images per step, but keep
        # >= 2 batch grid steps so both TensorCores (v7x) can get work.
        bt = max(1, min(8, rows_budget // th, _cdiv(n_groups, 2)))
    else:
        bt = 1
    return bt, th


@functools.partial(jax.jit, static_argnames=("h_tile", "batch_tile"))
def image_processing(inp, *, h_tile=None, batch_tile=None):
    """Equivalent of ImageProcessing.forward: VALID conv2d with the KV filter."""
    n, c, h, w = inp.shape
    assert c == 1, "KV-filter conv expects a single input channel"
    oh, ow = h - _HALO, w - _HALO
    assert oh > 0 and ow > 0, "spatial dims must be >= 5"

    dt = jnp.dtype(inp.dtype)
    row_mult = 16 if dt.itemsize < 4 else 8

    # ---- small-image lane packing: P images side by side along the lane axis
    # (VALID windows never cross an image boundary).
    p = 128 // w if w <= 64 else 1
    g = _cdiv(n, p)
    x = inp.reshape(n, h, w)
    if p > 1:
        x = jnp.pad(x, ((0, g * p - n), (0, 0), (0, 0)))
        x = x.reshape(g, p, h, w).transpose(0, 2, 1, 3).reshape(g, h, p * w)
    pw = p * w                                   # true packed width
    wp = max(128, _round_up(pw, 128))            # lane-dense block width

    # ---- generation-aware tiling / VMEM budget.
    vmem_cap = _vmem_capacity_bytes()
    bt_auto, th_auto = _choose_tiles(g, h, wp, dt.itemsize, row_mult,
                                     budget_bytes=vmem_cap // 5)
    th = th_auto if h_tile is None else _round_up(max(int(h_tile), row_mult),
                                                  row_mult)
    bt = bt_auto if batch_tile is None else max(1, int(batch_tile))

    nh = _cdiv(h, th)
    nb = _cdiv(g, bt)
    h_in = nh * th
    g_pad = nb * bt

    x = jnp.pad(x, ((0, g_pad - g), (0, h_in - h), (0, wp - pw)))

    blk_bytes = bt * th * wp * dt.itemsize
    scr_bytes = 2 * bt * (th + _NEW0) * wp * 4
    vmem_limit = 4 * blk_bytes + scr_bytes + (8 << 20)
    vmem_limit = int(max(32 << 20, min(vmem_limit, (vmem_cap * 3) // 4)))

    # The row-tile axis carries a 4-row halo in VMEM scratch -> it must stay
    # the innermost, sequentially executed ("arbitrary") grid axis.
    out_padded = pl.pallas_call(
        _kv_conv_kernel,
        out_shape=jax.ShapeDtypeStruct((g_pad, h_in, wp), inp.dtype),
        grid_spec=pltpu.PrefetchScalarGridSpec(
            num_scalar_prefetch=0,
            grid=(nb, nh),
            in_specs=[pl.BlockSpec((bt, th, wp), lambda b, r: (b, r, 0))],
            out_specs=pl.BlockSpec((bt, th, wp), lambda b, r: (b, r, 0)),
            scratch_shapes=[pltpu.VMEM((bt, th + _NEW0, wp), jnp.float32),
                            pltpu.VMEM((bt, th + _NEW0, wp), jnp.float32)],
        ),
        compiler_params=pltpu.CompilerParams(
            dimension_semantics=("parallel", "arbitrary"),
            vmem_limit_bytes=vmem_limit),
    )(x)

    # Padded-output row p / col q hold true output row p-4 / col q-2.
    out = out_padded[:g, _HALO:_HALO + oh, :pw]          # (g, oh, pw)
    if p > 1:
        out = out.reshape(g, oh, p, w)[:, :, :, _COL_OFF:_COL_OFF + ow]
        out = out.transpose(0, 2, 1, 3).reshape(g * p, oh, ow)[:n]
    else:
        out = out[:, :, _COL_OFF:_COL_OFF + ow]
    return out.reshape(n, 1, oh, ow)


def _reference(inp):
    """Pure-JAX reference (lax conv) for correctness checking."""
    filt = jnp.asarray(_KV).reshape(1, 1, _K, _K)
    return jax.lax.conv_general_dilated(
        inp.astype(jnp.float32), filt, window_strides=(1, 1), padding="VALID",
        dimension_numbers=("NCHW", "OIHW", "NCHW")).astype(inp.dtype)


if __name__ == "__main__":
    key = jax.random.PRNGKey(0)
    k1, k2, k3, k4 = jax.random.split(key, 4)

    # Canonical small frame: exercises the 8-images-per-128-lane packing path.
    x1 = jax.random.normal(k1, (2, 1, 16, 16), dtype=jnp.float32)
    out1 = jax.block_until_ready(image_processing(x1))
    assert out1.shape == (2, 1, 12, 12), out1.shape
    np.testing.assert_allclose(np.asarray(out1), np.asarray(_reference(x1)),
                               rtol=1e-5, atol=1e-4)

    # Row-tiled (halo-carry) + batch-tiled + 2-way lane packing + padding.
    x2 = jax.random.normal(k2, (3, 1, 37, 45), dtype=jnp.float32)
    out2 = jax.block_until_ready(image_processing(x2, h_tile=8, batch_tile=2))
    assert out2.shape == (3, 1, 33, 41), out2.shape
    np.testing.assert_allclose(np.asarray(out2), np.asarray(_reference(x2)),
                               rtol=1e-5, atol=1e-4)

    # Unpacked lane-dense path (w > 64, padded to 256 lanes, roll wrap cropped).
    x3 = jax.random.normal(k3, (1, 1, 24, 200), dtype=jnp.float32)
    out3 = jax.block_until_ready(image_processing(x3))
    assert out3.shape == (1, 1, 20, 196), out3.shape
    np.testing.assert_allclose(np.asarray(out3), np.asarray(_reference(x3)),
                               rtol=1e-5, atol=1e-4)

    # bf16 storage dtype (rolls stay bf16, accumulation in f32).
    x4 = jax.random.normal(k4, (2, 1, 40, 64), dtype=jnp.bfloat16)
    out4 = jax.block_until_ready(image_processing(x4))
    assert out4.shape == (2, 1, 36, 60), out4.shape
    np.testing.assert_allclose(np.asarray(out4.astype(jnp.float32)),
                               np.asarray(_reference(x4).astype(jnp.float32)),
                               rtol=2e-2, atol=2e-2)

    print("KERNEL_OK")
</pallas_src>

<mosaic_0001>
module attributes {stable_mosaic.version = 11 : i64} {
  func.func @_kv_conv_kernel(%arg0: i32, %arg1: i32, %arg2: memref<1x16x128xf32, #tpu.memory_space<vmem>>, %arg3: memref<1x16x128xf32, #tpu.memory_space<vmem>>, %arg4: memref<1x24x128xf32, #tpu.memory_space<vmem>>, %arg5: memref<1x24x128xf32, #tpu.memory_space<vmem>>) attributes {dimension_semantics = [#tpu.dimension_semantics<parallel>, #tpu.dimension_semantics<arbitrary>], iteration_bounds = array<i64: 1, 1>, scalar_prefetch = 0 : i64, scratch_operands = 2 : i64, tpu.core_type = #tpu.core_type<tc>, window_params = [{transform_indices = @transform_0, window_bounds = array<i64: 1, 16, 128>}, {transform_indices = @transform_1, window_bounds = array<i64: 1, 16, 128>}]} {
    %c0_i32 = arith.constant 0 : i32
    %0 = arith.cmpi eq, %arg1, %c0_i32 : i32
    %1 = arith.extui %0 : i1 to i32
    %c0_i32_0 = arith.constant 0 : i32
    %2 = arith.cmpi ne, %1, %c0_i32_0 : i32
    scf.if %2 {
      %cst_32 = arith.constant 0.000000e+00 : f32
      %54 = vector.broadcast %cst_32 : f32 to vector<1x8x128xf32>
      %c0_33 = arith.constant 0 : index
      %c0_34 = arith.constant 0 : index
      %c0_35 = arith.constant 0 : index
      %55 = vector.load %arg4[%c0_33, %c0_34, %c0_35] : memref<1x24x128xf32, #tpu.memory_space<vmem>>, vector<1x8x128xf32>
      tpu.vector_store %arg4[%c0_33, %c0_34, %c0_35], %54 {strides = array<i32>} : memref<1x24x128xf32, #tpu.memory_space<vmem>>, vector<1x8x128xf32>,
      %c0_36 = arith.constant 0 : index
      %c0_37 = arith.constant 0 : index
      %c0_38 = arith.constant 0 : index
      %56 = vector.load %arg5[%c0_36, %c0_37, %c0_38] : memref<1x24x128xf32, #tpu.memory_space<vmem>>, vector<1x8x128xf32>
      tpu.vector_store %arg5[%c0_36, %c0_37, %c0_38], %54 {strides = array<i32>} : memref<1x24x128xf32, #tpu.memory_space<vmem>>, vector<1x8x128xf32>,
    } else {
    }
    %c0 = arith.constant 0 : index
    %c0_1 = arith.constant 0 : index
    %c0_2 = arith.constant 0 : index
    %3 = vector.load %arg2[%c0, %c0_1, %c0_2] : memref<1x16x128xf32, #tpu.memory_space<vmem>>, vector<1x16x128xf32>
    %4 = vector.shape_cast %3 : vector<1x16x128xf32> to vector<16x128xf32>
    %c1_i32 = arith.constant 1 : i32
    %5 = tpu.dynamic_rotate %4 by %c1_i32 dim 1 : vector<16x128xf32>, i32 -> vector<16x128xf32>
    %c127_i32 = arith.constant 127 : i32
    %6 = tpu.dynamic_rotate %4 by %c127_i32 dim 1 : vector<16x128xf32>, i32 -> vector<16x128xf32>
    %c2_i32 = arith.constant 2 : i32
    %7 = tpu.dynamic_rotate %4 by %c2_i32 dim 1 : vector<16x128xf32>, i32 -> vector<16x128xf32>
    %c126_i32 = arith.constant 126 : i32
    %8 = tpu.dynamic_rotate %4 by %c126_i32 dim 1 : vector<16x128xf32>, i32 -> vector<16x128xf32>
    %9 = arith.addf %5, %6 : vector<16x128xf32>
    %10 = arith.addf %7, %8 : vector<16x128xf32>
    %11 = arith.subf %4, %9 : vector<16x128xf32>
    %cst = arith.constant 2.000000e+00 : f32
    %12 = vector.broadcast %cst : f32 to vector<16x128xf32>
    %13 = arith.mulf %12, %11 : vector<16x128xf32>
    %14 = arith.addf %10, %13 : vector<16x128xf32>
    %c0_3 = arith.constant 0 : index
    %c8 = arith.constant 8 : index
    %c0_4 = arith.constant 0 : index
    %15 = vector.load %arg4[%c0_3, %c8, %c0_4] : memref<1x24x128xf32, #tpu.memory_space<vmem>>, vector<1x16x128xf32>
    %16 = vector.shape_cast %15 : vector<1x16x128xf32> to vector<16x128xf32>
    %17 = vector.shape_cast %14 : vector<16x128xf32> to vector<1x16x128xf32>
    tpu.vector_store %arg4[%c0_3, %c8, %c0_4], %17 {strides = array<i32>} : memref<1x24x128xf32, #tpu.memory_space<vmem>>, vector<1x16x128xf32>,
    %cst_5 = arith.constant 2.000000e+00 : f32
    %18 = vector.broadcast %cst_5 : f32 to vector<16x128xf32>
    %19 = arith.mulf %18, %4 : vector<16x128xf32>
    %20 = arith.subf %9, %19 : vector<16x128xf32>
    %c0_6 = arith.constant 0 : index
    %c8_7 = arith.constant 8 : index
    %c0_8 = arith.constant 0 : index
    %21 = vector.load %arg5[%c0_6, %c8_7, %c0_8] : memref<1x24x128xf32, #tpu.memory_space<vmem>>, vector<1x16x128xf32>
    %22 = vector.shape_cast %21 : vector<1x16x128xf32> to vector<16x128xf32>
    %23 = vector.shape_cast %20 : vector<16x128xf32> to vector<1x16x128xf32>
    tpu.vector_store %arg5[%c0_6, %c8_7, %c0_8], %23 {strides = array<i32>} : memref<1x24x128xf32, #tpu.memory_space<vmem>>, vector<1x16x128xf32>,
    %c0_9 = arith.constant 0 : index
    %c0_10 = arith.constant 0 : index
    %c0_11 = arith.constant 0 : index
    %24 = vector.load %arg4[%c0_9, %c0_10, %c0_11] : memref<1x24x128xf32, #tpu.memory_space<vmem>>, vector<1x24x128xf32>
    %c0_12 = arith.constant 0 : index
    %c0_13 = arith.constant 0 : index
    %c0_14 = arith.constant 0 : index
    %25 = vector.load %arg5[%c0_12, %c0_13, %c0_14] : memref<1x24x128xf32, #tpu.memory_space<vmem>>, vector<1x24x128xf32>
    %26 = vector.extract_strided_slice %24 {offsets = [0, 4, 0], sizes = [1, 16, 128], strides = [1, 1, 1]} : vector<1x24x128xf32> to vector<1x16x128xf32>
    %27 = vector.extract_strided_slice %24 {offsets = [0, 8, 0], sizes = [1, 16, 128], strides = [1, 1, 1]} : vector<1x24x128xf32> to vector<1x16x128xf32>
    %28 = arith.addf %26, %27 : vector<1x16x128xf32>
    %29 = vector.extract_strided_slice %24 {offsets = [0, 6, 0], sizes = [1, 16, 128], strides = [1, 1, 1]} : vector<1x24x128xf32> to vector<1x16x128xf32>
    %30 = vector.extract_strided_slice %24 {offsets = [0, 5, 0], sizes = [1, 16, 128], strides = [1, 1, 1]} : vector<1x24x128xf32> to vector<1x16x128xf32>
    %31 = arith.subf %29, %30 : vector<1x16x128xf32>
    %32 = vector.extract_strided_slice %24 {offsets = [0, 7, 0], sizes = [1, 16, 128], strides = [1, 1, 1]} : vector<1x24x128xf32> to vector<1x16x128xf32>
    %33 = arith.subf %31, %32 : vector<1x16x128xf32>
    %cst_15 = arith.constant 2.000000e+00 : f32
    %34 = vector.broadcast %cst_15 : f32 to vector<1x16x128xf32>
    %35 = arith.mulf %34, %33 : vector<1x16x128xf32>
    %36 = arith.addf %28, %35 : vector<1x16x128xf32>
    %37 = vector.extract_strided_slice %25 {offsets = [0, 5, 0], sizes = [1, 16, 128], strides = [1, 1, 1]} : vector<1x24x128xf32> to vector<1x16x128xf32>
    %38 = vector.extract_strided_slice %25 {offsets = [0, 7, 0], sizes = [1, 16, 128], strides = [1, 1, 1]} : vector<1x24x128xf32> to vector<1x16x128xf32>
    %39 = arith.addf %37, %38 : vector<1x16x128xf32>
    %40 = vector.extract_strided_slice %25 {offsets = [0, 6, 0], sizes = [1, 16, 128], strides = [1, 1, 1]} : vector<1x24x128xf32> to vector<1x16x128xf32>
    %cst_16 = arith.constant 2.000000e+00 : f32
    %41 = vector.broadcast %cst_16 : f32 to vector<1x16x128xf32>
    %42 = arith.mulf %41, %40 : vector<1x16x128xf32>
    %43 = arith.subf %39, %42 : vector<1x16x128xf32>
    %cst_17 = arith.constant -0.0833333358 : f32
    %44 = vector.broadcast %cst_17 : f32 to vector<1x16x128xf32>
    %45 = arith.mulf %44, %36 : vector<1x16x128xf32>
    %cst_18 = arith.constant -0.166666672 : f32
    %46 = vector.broadcast %cst_18 : f32 to vector<1x16x128xf32>
    %47 = arith.mulf %46, %43 : vector<1x16x128xf32>
    %48 = arith.addf %45, %47 : vector<1x16x128xf32>
    %c0_19 = arith.constant 0 : index
    %c0_20 = arith.constant 0 : index
    %c0_21 = arith.constant 0 : index
    %49 = vector.load %arg3[%c0_19, %c0_20, %c0_21] : memref<1x16x128xf32, #tpu.memory_space<vmem>>, vector<1x16x128xf32>
    tpu.vector_store %arg3[%c0_19, %c0_20, %c0_21], %48 {strides = array<i32>} : memref<1x16x128xf32, #tpu.memory_space<vmem>>, vector<1x16x128xf32>,
    %c0_22 = arith.constant 0 : index
    %c20 = arith.constant 20 : index
    %c0_23 = arith.constant 0 : index
    %50 = vector.load %arg4[%c0_22, %c20, %c0_23] : memref<1x24x128xf32, #tpu.memory_space<vmem>>, vector<1x4x128xf32>
    %c0_24 = arith.constant 0 : index
    %c4 = arith.constant 4 : index
    %c0_25 = arith.constant 0 : index
    %51 = vector.load %arg4[%c0_24, %c4, %c0_25] : memref<1x24x128xf32, #tpu.memory_space<vmem>>, vector<1x4x128xf32>
    tpu.vector_store %arg4[%c0_24, %c4, %c0_25], %50 {strides = array<i32>} : memref<1x24x128xf32, #tpu.memory_space<vmem>>, vector<1x4x128xf32>,
    %c0_26 = arith.constant 0 : index
    %c20_27 = arith.constant 20 : index
    %c0_28 = arith.constant 0 : index
    %52 = vector.load %arg5[%c0_26, %c20_27, %c0_28] : memref<1x24x128xf32, #tpu.memory_space<vmem>>, vector<1x4x128xf32>
    %c0_29 = arith.constant 0 : index
    %c4_30 = arith.constant 4 : index
    %c0_31 = arith.constant 0 : index
    %53 = vector.load %arg5[%c0_29, %c4_30, %c0_31] : memref<1x24x128xf32, #tpu.memory_space<vmem>>, vector<1x4x128xf32>
    tpu.vector_store %arg5[%c0_29, %c4_30, %c0_31], %52 {strides = array<i32>} : memref<1x24x128xf32, #tpu.memory_space<vmem>>, vector<1x4x128xf32>,
    return
  }
  func.func @transform_0(%arg0: i32, %arg1: i32) -> (i32, i32, i32) {
    %c0_i32 = arith.constant 0 : i32
    %c0_i32_0 = arith.constant 0 : i32
    return %arg0, %arg1, %c0_i32 : i32, i32, i32
  }
  func.func @transform_1(%arg0: i32, %arg1: i32) -> (i32, i32, i32) {
    %c0_i32 = arith.constant 0 : i32
    %c0_i32_0 = arith.constant 0 : i32
    return %arg0, %arg1, %c0_i32 : i32, i32, i32
  }
}

</mosaic_0001>

<llo_original>
// kernel: image_processing.1
$region0: #{image_processing.1}
  #allocation0 [shape = 'u32[]', space=smem, size = 0x4, offset = 0x4, fixed_abs, tag = 'smem constant byte address 0x4 - core index']
  #allocation1 [shape = 'u32[144,128]{1,0:T(1,128)}', space=vmem, size = 0x12000, scoped, tag = 'internal scratch']
  #allocation2 [shape = 'f32[1,24,128]{2,1,0:T(8,128)}', space=vmem, size = 0x3000, scoped, tag = 'scratch operand']
  #allocation3 [shape = 'f32[1,24,128]{2,1,0:T(8,128)}', space=vmem, size = 0x3000, scoped, tag = 'scratch operand']
  %s0 = inlined_call_operand.vmem [shape: f32[1,16,128], index: 0, kind: input, shape index: {}]
  %s1 = inlined_call_operand.vmem [shape: f32[1,16,128], index: 1, kind: output, shape index: {}]
  %s2 = sld [smem:[#allocation0]]
  $region18: #{image_processing.1} parent=0
    _
  %s4 = ssub.s32 1, %s2
  %s5 = scalar_select 0, %s4, %s2
  // Predicated region
  $region2: #{image_processing.1} parent=0 // pred_check
    _
  $region3: #{image_processing.1} parent=0 // pred_check_branch
    %7 = sbr.rel (0) target = $region5
  $region4: #{image_processing.1} parent=0 // pred_region
    _
  $region5: #{image_processing.1} parent=0 // pred_fallthru
    _
  %p8 = scmp.eq.s32.totalorder 0, 0
  // Predicated region
  $region6: #{image_processing.1} parent=0 // pred_check
    %p9 = pneg %p8
  $region7: #{image_processing.1} parent=0 // pred_check_branch
    %11 = sbr.rel (%p9) target = $region9
  $region8: #{image_processing.1} parent=0 // pred_region
    %12 = vst [vmem:[#allocation2] sm:$0xff] 0.0
    %13 = vst [vmem:[#allocation3] sm:$0xff] 0.0
  $region9: #{image_processing.1} parent=0 // pred_fallthru
    _
  %v14 = vld [vmem:[%s0] sm:$0xff]
  %v15 = vld [vmem:[%s0 + $0x8] sm:$0xff]
  %16 = vrot.lane.b32.xlu0 %v14, 1
  %v17 = vpop.permute.xlu0 %16
  %18 = vrot.lane.b32.xlu0 %v15, 1
  %v19 = vpop.permute.xlu0 %18
  %20 = vrot.lane.b32.xlu0 %v14, 127
  %v21 = vpop.permute.xlu0 %20
  %22 = vrot.lane.b32.xlu0 %v15, 127
  %v23 = vpop.permute.xlu0 %22
  %24 = vrot.lane.b32.xlu0 %v14, 2
  %v25 = vpop.permute.xlu0 %24
  %26 = vrot.lane.b32.xlu0 %v15, 2
  %v27 = vpop.permute.xlu0 %26
  %28 = vrot.lane.b32.xlu0 %v14, 126
  %v29 = vpop.permute.xlu0 %28
  %30 = vrot.lane.b32.xlu0 %v15, 126
  %v31 = vpop.permute.xlu0 %30
  %v32 = vadd.f32 %v17, %v21
  %v33 = vadd.f32 %v19, %v23
  %v34 = vadd.f32 %v25, %v29
  %v35 = vadd.f32 %v27, %v31
  %v36 = vsub.f32 %v14, %v32
  %v37 = vsub.f32 %v15, %v33
  %v38 = vmul.f32 %v36, 2.0
  %v39 = vmul.f32 %v37, 2.0
  %v40 = vadd.f32 %v34, %v38
  %v41 = vadd.f32 %v35, %v39
  %42 = vst [vmem:[#allocation2 + $0x8] sm:$0xff] %v40
  %43 = vst [vmem:[#allocation2 + $0x10] sm:$0xff] %v41
  %v44 = vmul.f32 %v14, 2.0
  %v45 = vmul.f32 %v15, 2.0
  %v46 = vsub.f32 %v32, %v44
  %v47 = vsub.f32 %v33, %v45
  %48 = vst [vmem:[#allocation3 + $0x8] sm:$0xff] %v46
  %49 = vst [vmem:[#allocation3 + $0x10] sm:$0xff] %v47
  %v50 = vld [vmem:[#allocation2] sm:$0xff]
  %v51 = vld [vmem:[#allocation2 + $0x8] sm:$0xff]
  %v52 = vld [vmem:[#allocation2 + $0x10] sm:$0xff]
  %v53 = vld [vmem:[#allocation3] sm:$0xff]
  %v54 = vld [vmem:[#allocation3 + $0x8] sm:$0xff]
  %v55 = vld [vmem:[#allocation3 + $0x10] sm:$0xff]
  %vm58 = vcmask 1043456
  %v59 = vrot.slane %v51, 4
  %v60 = vrot.slane %v52, 4
  %v61 = vsel %vm58, %v59, %v60
  %v65 = vadd.f32 %v50, %v59
  %v66 = vadd.f32 %v51, %v61
  %v67 = vadd.f32 %v52, %v60
  %vm69 = vcmask 1040384
  %v70 = vrot.slane %v50, 7
  %v71 = vrot.slane %v51, 7
  %v72 = vsel %vm69, %v70, %v71
  %v73 = vrot.slane %v52, 7
  %v74 = vsel %vm69, %v71, %v73
  %v78 = vsub.f32 %v50, %v70
  %v79 = vsub.f32 %v51, %v72
  %v80 = vsub.f32 %v52, %v74
  %vm81 = vcmask 1046528
  %v82 = vrot.slane %v50, 1
  %v83 = vrot.slane %v51, 1
  %v84 = vsel %vm81, %v82, %v83
  %v85 = vrot.slane %v52, 1
  %v86 = vsel %vm81, %v83, %v85
  %v90 = vsub.f32 %v78, %v84
  %v91 = vsub.f32 %v79, %v86
  %v92 = vsub.f32 %v80, %v85
  %v93 = vmul.f32 %v90, 2.0
  %v94 = vmul.f32 %v91, 2.0
  %v95 = vmul.f32 %v92, 2.0
  %vm99 = vcmask 1045504
  %v100 = vrot.slane %v93, 2
  %v101 = vrot.slane %v94, 2
  %v102 = vsel %vm99, %v100, %v101
  %v103 = vrot.slane %v95, 2
  %v104 = vsel %vm99, %v101, %v103
  %v108 = vadd.f32 %v65, %v102
  %v109 = vadd.f32 %v66, %v104
  %v110 = vadd.f32 %v67, %v103
  %v114 = vrot.slane %v53, 2
  %v115 = vrot.slane %v54, 2
  %v116 = vsel %vm99, %v114, %v115
  %v117 = vrot.slane %v55, 2
  %v118 = vsel %vm99, %v115, %v117
  %v122 = vadd.f32 %v53, %v116
  %v123 = vadd.f32 %v54, %v118
  %v124 = vadd.f32 %v55, %v117
  %v125 = vmul.f32 %v53, 2.0
  %v126 = vmul.f32 %v54, 2.0
  %v127 = vmul.f32 %v55, 2.0
  %v131 = vrot.slane %v125, 1
  %v132 = vrot.slane %v126, 1
  %v133 = vsel %vm81, %v131, %v132
  %v134 = vrot.slane %v127, 1
  %v135 = vsel %vm81, %v132, %v134
  %v139 = vsub.f32 %v122, %v133
  %v140 = vsub.f32 %v123, %v135
  %v141 = vsub.f32 %v124, %v134
  %v142 = vmul.f32 %v108, -0.083333336
  %v143 = vmul.f32 %v109, -0.083333336
  %v144 = vmul.f32 %v110, -0.083333336
  %v145 = vmul.f32 %v139, -0.16666667
  %v146 = vmul.f32 %v140, -0.16666667
  %v147 = vmul.f32 %v141, -0.16666667
  %v151 = vrot.slane %v145, 1
  %v152 = vrot.slane %v146, 1
  %v153 = vsel %vm81, %v151, %v152
  %v154 = vrot.slane %v147, 1
  %v155 = vsel %vm81, %v152, %v154
  %v159 = vadd.f32 %v142, %v153
  %v160 = vadd.f32 %v143, %v155
  %v161 = vadd.f32 %v144, %v154
  %162 = vst [vmem:[%s1 - $0x4] sm:$0xf0] %v159
  %163 = vst [vmem:[%s1 + $0x4] sm:$0xff] %v160
  %164 = vst [vmem:[%s1 + $0xc] sm:$0xf] %v161
  %v165 = vld [vmem:[#allocation2 + $0x14] sm:$0xf]
  %166 = vst [vmem:[#allocation2 + $0x4] sm:$0xf] %v165
  %v167 = vld [vmem:[#allocation3 + $0x14] sm:$0xf]
  %168 = vst [vmem:[#allocation3 + $0x4] sm:$0xf] %v167
  // Predicated region
  $region10: #{image_processing.1} parent=0 // pred_check
    _
  $region11: #{image_processing.1} parent=0 // pred_check_branch
    %170 = sbr.rel (0) target = $region13
  $region12: #{image_processing.1} parent=0 // pred_region
    _
  $region13: #{image_processing.1} parent=0 // pred_fallthru
    _
  // Predicated region
  $region14: #{image_processing.1} parent=0 // pred_check
    _
  $region15: #{image_processing.1} parent=0 // pred_check_branch
    %172 = sbr.rel (0) target = $region17
  $region16: #{image_processing.1} parent=0 // pred_region
    _
  $region17: #{image_processing.1} parent=0 // pred_fallthru
    _

</llo_original>
